<compile_context>
chip_gen: v5e
topology: v5e:2x2
jax: 0.10.0
libtpu: 0.0.40
codegen_flags: <defaults>
</compile_context>

<pallas_src>
import functools

import jax
import jax.numpy as jnp
from jax.experimental import pallas as pl
from jax.experimental.pallas import tpu as pltpu

HIDDEN = 110          # nn.Linear(in_size, 110) in the PyTorch module
LANE = 128            # TPU lane width


def _round_up(x, m):
    return ((x + m - 1) // m) * m


HIDDEN_PAD = _round_up(HIDDEN, LANE)   # 128


def _mlp_kernel(x_ref, w1_ref, b1_ref, w2_ref, b2_ref, o_ref):
    out_size = o_ref.shape[-1]
    # x tile: (TILE_N, in_size) f32 -> bf16 for the MXU, accumulate in f32.
    x = x_ref[...].astype(jnp.bfloat16)
    h = jnp.dot(x, w1_ref[...], preferred_element_type=jnp.float32) + b1_ref[...]
    h = jnp.maximum(h, 0.0)                                   # f32 ReLU (VPU)
    # Lane-dense 128-wide matmul; slice to the true out_size only for the
    # (narrow, masked) store so the HBM writeback carries no padding.
    y = jnp.dot(h.astype(jnp.bfloat16), w2_ref[...],
                preferred_element_type=jnp.float32)
    o_ref[...] = y[:, :out_size] + b2_ref[...]


def init_params(key, in_size, out_size):
    """PyTorch-default Linear init: U(-1/sqrt(fan_in), 1/sqrt(fan_in)).
    Weights stored transposed ((in, out)) so the kernel does x @ W."""
    k1, k2, k3, k4 = jax.random.split(key, 4)
    bound1 = 1.0 / jnp.sqrt(in_size)
    bound2 = 1.0 / jnp.sqrt(HIDDEN)
    w1 = jax.random.uniform(k1, (in_size, HIDDEN), jnp.float32, -bound1, bound1)
    b1 = jax.random.uniform(k2, (1, HIDDEN), jnp.float32, -bound1, bound1)
    w2 = jax.random.uniform(k3, (HIDDEN, out_size), jnp.float32, -bound2, bound2)
    b2 = jax.random.uniform(k4, (1, out_size), jnp.float32, -bound2, bound2)
    return w1, b1, w2, b2


def prepare_params(w1, b1, w2, b2):
    """One-time padding/casting of params for the kernel.

    Hidden dim is zero-padded 110 -> 128 (exact: ReLU(0)=0 and zero W2 rows
    contribute nothing) and W2's output dim is zero-padded to a multiple of
    128 for a lane-dense matmul; the padded columns are sliced off inside
    the kernel before the store.  Weights bf16 (MXU inputs), biases f32.
    """
    in_size, hidden = w1.shape
    out_size = w2.shape[1]
    out_pad = _round_up(out_size, LANE)

    w1p = jnp.zeros((in_size, HIDDEN_PAD), jnp.bfloat16)
    w1p = w1p.at[:, :hidden].set(w1.astype(jnp.bfloat16))
    b1p = jnp.zeros((1, HIDDEN_PAD), jnp.float32)
    b1p = b1p.at[:, :hidden].set(b1.reshape(1, -1))
    w2p = jnp.zeros((HIDDEN_PAD, out_pad), jnp.bfloat16)
    w2p = w2p.at[:hidden, :out_size].set(w2.astype(jnp.bfloat16))
    b2p = b2.reshape(1, out_size).astype(jnp.float32)          # unpadded
    return w1p, b1p, w2p, b2p, out_size


@functools.partial(jax.jit, static_argnames=("out_size", "tile_n"))
def neuralnet_forward(x, w1p, b1p, w2p, b2p, *, out_size, tile_n=8192):
    """f(x) = ReLU(x @ W1 + b1) @ W2 + b2  (padded params from prepare_params).

    x: (N, in_size) f32.  Returns (N, out_size) f32.
    """
    N, in_size = x.shape
    hidden_pad = w1p.shape[1]
    out_pad = w2p.shape[1]

    # Batch tile: big enough to amortize the ~0.35us per-grid-step cost,
    # but clamped so the grid has >= 4 steps when N is large (keeps both
    # v7x TensorCores busy under dimension_semantics=("parallel",)).
    # Always a multiple of 8 sublanes.
    tile_n = _round_up(max(8, tile_n), 8)
    tile_n = min(tile_n, _round_up(pl.cdiv(N, 4), 8))
    tile_n = max(8, tile_n)

    n_pad = _round_up(N, tile_n)
    if n_pad != N:
        x = jnp.pad(x, ((0, n_pad - N), (0, 0)))   # zero rows, sliced off below

    grid = (n_pad // tile_n,)

    # VMEM budget from the actual working set: double-buffered x/out tiles,
    # resident weights, and in-kernel intermediates, plus headroom.  Capped
    # at 48 MiB (v7x has only 64 MiB physical VMEM).
    bytes_tiles = 2 * tile_n * (in_size * 4 + out_size * 4)
    bytes_weights = (w1p.size * 2 + b1p.size * 4 + w2p.size * 2 + b2p.size * 4)
    bytes_interm = tile_n * (in_size * 2 + hidden_pad * (4 + 2) + out_pad * 4)
    vmem_limit = bytes_tiles + bytes_weights + bytes_interm + 4 * 1024 * 1024
    vmem_limit = int(min(48 * 1024 * 1024, max(16 * 1024 * 1024, vmem_limit)))

    cost = pl.CostEstimate(
        flops=2 * n_pad * (in_size * hidden_pad + hidden_pad * out_pad),
        transcendentals=0,
        bytes_accessed=(n_pad * in_size * 4           # x read
                        + n_pad * out_size * 4        # out write (unpadded)
                        + bytes_weights),             # resident params
    )

    out = pl.pallas_call(
        _mlp_kernel,
        out_shape=jax.ShapeDtypeStruct((n_pad, out_size), jnp.float32),
        grid=grid,
        in_specs=[
            # x tiles stream per grid step (double-buffered by Pallas).
            pl.BlockSpec((tile_n, in_size), lambda i: (i, 0)),
            # Weights/biases: same block every step -> resident in VMEM.
            pl.BlockSpec((in_size, hidden_pad), lambda i: (0, 0)),
            pl.BlockSpec((1, hidden_pad), lambda i: (0, 0)),
            pl.BlockSpec((hidden_pad, out_pad), lambda i: (0, 0)),
            pl.BlockSpec((1, out_size), lambda i: (0, 0)),
        ],
        # Unpadded output block: full last dim (= out_size) is legal and cuts
        # HBM write volume by up to out_pad/out_size vs the padded slab.
        out_specs=pl.BlockSpec((tile_n, out_size), lambda i: (i, 0)),
        compiler_params=pltpu.CompilerParams(
            dimension_semantics=("parallel",),        # batch axis independent
            vmem_limit_bytes=vmem_limit,
        ),
        cost_estimate=cost,
    )(x, w1p, b1p, w2p, b2p)

    # Drop batch padding rows only (output columns are already unpadded).
    if n_pad != N:
        out = out[:N]
    return out


def _reference_checks(x, w1, b1, w2, b2, y):
    # Reference 1: identical bf16-input / f32-accumulate math in pure JAX.
    xb = x.astype(jnp.bfloat16)
    h_ref = jnp.maximum(
        jnp.dot(xb, w1.astype(jnp.bfloat16),
                preferred_element_type=jnp.float32) + b1, 0.0)
    y_ref_bf16 = jnp.dot(h_ref.astype(jnp.bfloat16), w2.astype(jnp.bfloat16),
                         preferred_element_type=jnp.float32) + b2
    assert jnp.allclose(y, y_ref_bf16, atol=2e-3, rtol=2e-3)

    # Reference 2: full-f32 PyTorch-equivalent math (loose tol: bf16 MXU inputs).
    y_ref_f32 = jnp.maximum(x @ w1 + b1, 0.0) @ w2 + b2
    assert jnp.allclose(y, y_ref_f32, atol=5e-2, rtol=5e-2)


if __name__ == "__main__":
    # Small shapes consistent with forward(x: (N, in_size)) -> (N, out_size).
    in_size, out_size = 32, 4

    key = jax.random.PRNGKey(0)
    kx1, kx2, kp = jax.random.split(key, 3)

    w1, b1, w2, b2 = init_params(kp, in_size, out_size)
    w1p, b1p, w2p, b2p, osz = prepare_params(w1, b1, w2, b2)

    # Case 1: tiny batch (single grid step, tile clamped to 8).
    x1 = jax.random.normal(kx1, (8, in_size), jnp.float32)
    y1 = neuralnet_forward(x1, w1p, b1p, w2p, b2p, out_size=osz)
    jax.block_until_ready(y1)
    assert y1.shape == (8, out_size)
    _reference_checks(x1, w1, b1, w2, b2, y1)

    # Case 2: N not a multiple of 8 -> exercises batch padding + 4-step grid.
    x2 = jax.random.normal(kx2, (2000, in_size), jnp.float32)
    y2 = neuralnet_forward(x2, w1p, b1p, w2p, b2p, out_size=osz)
    jax.block_until_ready(y2)
    assert y2.shape == (2000, out_size)
    _reference_checks(x2, w1, b1, w2, b2, y2)

    # TODO(synk): loss_fn, Adam optimizer and step() (backward pass) are
    # training-side and intentionally not implemented here.

    print("KERNEL_OK")
</pallas_src>

<mosaic_0001>
module attributes {stable_mosaic.version = 11 : i64} {
  func.func @_mlp_kernel(%arg0: i32, %arg1: memref<8x32xf32, #tpu.memory_space<vmem>>, %arg2: memref<32x128xbf16, #tpu.memory_space<vmem>>, %arg3: memref<1x128xf32, #tpu.memory_space<vmem>>, %arg4: memref<128x128xbf16, #tpu.memory_space<vmem>>, %arg5: memref<1x4xf32, #tpu.memory_space<vmem>>, %arg6: memref<8x4xf32, #tpu.memory_space<vmem>>) attributes {dimension_semantics = [#tpu.dimension_semantics<parallel>], iteration_bounds = array<i64: 1>, scalar_prefetch = 0 : i64, scratch_operands = 0 : i64, tpu.core_type = #tpu.core_type<tc>, window_params = [{transform_indices = @transform_0, window_bounds = array<i64: 8, 32>}, {pipeline_mode = #tpu.pipeline_mode<synchronous>, transform_indices = @transform_1, window_bounds = array<i64: 32, 128>}, {pipeline_mode = #tpu.pipeline_mode<synchronous>, transform_indices = @transform_2, window_bounds = array<i64: 1, 128>}, {pipeline_mode = #tpu.pipeline_mode<synchronous>, transform_indices = @transform_3, window_bounds = array<i64: 128, 128>}, {pipeline_mode = #tpu.pipeline_mode<synchronous>, transform_indices = @transform_4, window_bounds = array<i64: 1, 4>}, {transform_indices = @transform_5, window_bounds = array<i64: 8, 4>}]} {
    %c0 = arith.constant 0 : index
    %c0_0 = arith.constant 0 : index
    %0 = vector.load %arg1[%c0, %c0_0] : memref<8x32xf32, #tpu.memory_space<vmem>>, vector<8x32xf32>
    %1 = arith.truncf %0 : vector<8x32xf32> to vector<8x32xbf16>
    %c0_1 = arith.constant 0 : index
    %c0_2 = arith.constant 0 : index
    %2 = vector.load %arg2[%c0_1, %c0_2] : memref<32x128xbf16, #tpu.memory_space<vmem>>, vector<32x128xbf16>
    %cst = arith.constant dense<0.000000e+00> : vector<8x128xf32>
    %3 = tpu.matmul %1, %2, %cst {dimension_numbers = #tpu.dot_dimension_numbers<[1], [0], [0], [1], [0, 0, 1, 1], [], []>} : vector<8x32xbf16>, vector<32x128xbf16>, vector<8x128xf32> -> vector<8x128xf32>
    %c0_3 = arith.constant 0 : index
    %c0_4 = arith.constant 0 : index
    %4 = vector.load %arg3[%c0_3, %c0_4] : memref<1x128xf32, #tpu.memory_space<vmem>>, vector<1x128xf32>
    %5 = vector.broadcast %4 : vector<1x128xf32> to vector<8x128xf32>
    %6 = arith.addf %3, %5 : vector<8x128xf32>
    %cst_5 = arith.constant 0.000000e+00 : f32
    %7 = vector.broadcast %cst_5 : f32 to vector<8x128xf32>
    %8 = arith.maximumf %6, %7 : vector<8x128xf32>
    %9 = arith.truncf %8 : vector<8x128xf32> to vector<8x128xbf16>
    %c0_6 = arith.constant 0 : index
    %c0_7 = arith.constant 0 : index
    %10 = vector.load %arg4[%c0_6, %c0_7] : memref<128x128xbf16, #tpu.memory_space<vmem>>, vector<128x128xbf16>
    %cst_8 = arith.constant dense<0.000000e+00> : vector<8x128xf32>
    %11 = tpu.matmul %9, %10, %cst_8 {dimension_numbers = #tpu.dot_dimension_numbers<[1], [0], [0], [1], [0, 0, 1, 1], [], []>} : vector<8x128xbf16>, vector<128x128xbf16>, vector<8x128xf32> -> vector<8x128xf32>
    %12 = vector.extract_strided_slice %11 {offsets = [0, 0], sizes = [8, 4], strides = [1, 1]} : vector<8x128xf32> to vector<8x4xf32>
    %c0_9 = arith.constant 0 : index
    %c0_10 = arith.constant 0 : index
    %13 = vector.load %arg5[%c0_9, %c0_10] : memref<1x4xf32, #tpu.memory_space<vmem>>, vector<1x4xf32>
    %14 = vector.broadcast %13 : vector<1x4xf32> to vector<8x4xf32>
    %15 = arith.addf %12, %14 : vector<8x4xf32>
    %c0_11 = arith.constant 0 : index
    %c0_12 = arith.constant 0 : index
    %16 = vector.load %arg6[%c0_11, %c0_12] : memref<8x4xf32, #tpu.memory_space<vmem>>, vector<8x4xf32>
    tpu.vector_store %arg6[%c0_11, %c0_12], %15 {strides = array<i32>} : memref<8x4xf32, #tpu.memory_space<vmem>>, vector<8x4xf32>,
    return
  }
  func.func @transform_0(%arg0: i32) -> (i32, i32) {
    %c0_i32 = arith.constant 0 : i32
    %c0_i32_0 = arith.constant 0 : i32
    return %arg0, %c0_i32 : i32, i32
  }
  func.func @transform_1(%arg0: i32) -> (i32, i32) {
    %c0_i32 = arith.constant 0 : i32
    %c0_i32_0 = arith.constant 0 : i32
    %c0_i32_1 = arith.constant 0 : i32
    return %c0_i32, %c0_i32_0 : i32, i32
  }
  func.func @transform_2(%arg0: i32) -> (i32, i32) {
    %c0_i32 = arith.constant 0 : i32
    %c0_i32_0 = arith.constant 0 : i32
    %c0_i32_1 = arith.constant 0 : i32
    return %c0_i32, %c0_i32_0 : i32, i32
  }
  func.func @transform_3(%arg0: i32) -> (i32, i32) {
    %c0_i32 = arith.constant 0 : i32
    %c0_i32_0 = arith.constant 0 : i32
    %c0_i32_1 = arith.constant 0 : i32
    return %c0_i32, %c0_i32_0 : i32, i32
  }
  func.func @transform_4(%arg0: i32) -> (i32, i32) {
    %c0_i32 = arith.constant 0 : i32
    %c0_i32_0 = arith.constant 0 : i32
    %c0_i32_1 = arith.constant 0 : i32
    return %c0_i32, %c0_i32_0 : i32, i32
  }
  func.func @transform_5(%arg0: i32) -> (i32, i32) {
    %c0_i32 = arith.constant 0 : i32
    %c0_i32_0 = arith.constant 0 : i32
    return %arg0, %c0_i32 : i32, i32
  }
}

</mosaic_0001>

<llo_original>
// kernel: neuralnet_forward.1
$region0: #{neuralnet_forward.1}
  #allocation0 [shape = 'u32[]', space=smem, size = 0x4, offset = 0x4, fixed_abs, tag = 'smem constant byte address 0x4 - core index']
  #allocation1 [shape = 'u32[72,128]{1,0:T(1,128)}', space=vmem, size = 0x9000, scoped, tag = 'internal scratch']
  %s0 = inlined_call_operand.hbm [shape: f32[8,32], index: 0, kind: input, shape index: {}]
  %s1 = inlined_call_operand.hbm [shape: bf16[32,128], index: 1, kind: input, shape index: {}]
  %s2 = inlined_call_operand.vmem [shape: f32[1,128], index: 2, kind: input, shape index: {}]
  %s3 = inlined_call_operand.hbm [shape: bf16[128,128], index: 3, kind: input, shape index: {}]
  %s4 = inlined_call_operand.vmem [shape: f32[1,4], index: 4, kind: input, shape index: {}]
  %s5 = inlined_call_operand.vmem [shape: f32[8,4], index: 5, kind: output, shape index: {}]
  %s6 = sld [smem:[#allocation0]]
  $region42: #{neuralnet_forward.1} parent=0
    _
  %s8 = ssub.s32 1, %s6
  %s9 = scalar_select 0, %s8, %s6
  $region1: #{neuralnet_forward.1} parent=0
    #allocation2 [shape = 'u8[4096]{0}', space=vmem, size = 0x1000, scoped, tag = 'input window, operand 0, single buffered']
    #allocation3 [shape = 's32[1]{0}', space=sflag, size = 0x4, scoped, tag = 'scoped memory for neuralnet_forward.1']
    #allocation4 [shape = 'u8[8192]{0}', space=vmem, size = 0x2000, scoped, tag = 'input window, operand 1, single buffered']
    #allocation5 [shape = 's32[1]{0}', space=sflag, size = 0x4, scoped, tag = 'scoped memory for neuralnet_forward.1']
    #allocation6 [shape = 'u8[32768]{0}', space=vmem, size = 0x8000, scoped, tag = 'input window, operand 3, single buffered']
    %10 = vsyncpa [#allocation3], 0
    %11 = vsyncpa [#allocation5], 0
    // Predicated region
    $region2: #{neuralnet_forward.1} parent=1 // pred_check
      _
    $region3: #{neuralnet_forward.1} parent=1 // pred_check_branch
      %13 = sbr.rel (0) target = $region5
    $region4: #{neuralnet_forward.1} parent=1 // pred_region
      %15 = vsyncadd [#allocation3], 0
      %s17 = sshll.u32 %s0, 4
      %s18 = int_to_ptr.hbm [resolvable:$true] %s17
      %s19 = sshll.u32 [#allocation2], 4
      %s20 = int_to_ptr.vmem [resolvable:$true] %s19
      %22 = dma.hbm_to_vmem [thread:$0]  %s18, 128, %s20, [#allocation3]
    $region5: #{neuralnet_forward.1} parent=1 // pred_fallthru
      _
    // Predicated region
    $region6: #{neuralnet_forward.1} parent=1 // pred_check
      _
    $region7: #{neuralnet_forward.1} parent=1 // pred_check_branch
      %24 = sbr.rel (0) target = $region9
    $region8: #{neuralnet_forward.1} parent=1 // pred_region
      %26 = vsyncadd [#allocation5], 0
      %s27 = sshll.u32 %s1, 4
      %s28 = int_to_ptr.hbm [resolvable:$true] %s27
      %s29 = sshll.u32 [#allocation4], 4
      %s30 = int_to_ptr.vmem [resolvable:$true] %s29
      %35 = dma.hbm_to_vmem [thread:$0]  %s28, 256, %s30, [#allocation5], 64, 64, 4
    $region9: #{neuralnet_forward.1} parent=1 // pred_fallthru
      _
    // Predicated region
    $region10: #{neuralnet_forward.1} parent=1 // pred_check
      _
    $region11: #{neuralnet_forward.1} parent=1 // pred_check_branch
      %37 = sbr.rel (0) target = $region13
    $region12: #{neuralnet_forward.1} parent=1 // pred_region
      _
    $region13: #{neuralnet_forward.1} parent=1 // pred_fallthru
      _
    // Predicated region
    $region14: #{neuralnet_forward.1} parent=1 // pred_check
      _
    $region15: #{neuralnet_forward.1} parent=1 // pred_check_branch
      %39 = sbr.rel (0) target = $region17
    $region16: #{neuralnet_forward.1} parent=1 // pred_region
      %41 = vsyncadd [#allocation5], 0
      %s42 = sshll.u32 %s3, 4
      %s43 = int_to_ptr.hbm [resolvable:$true] %s42
      %s44 = sshll.u32 [#allocation6], 4
      %s45 = int_to_ptr.vmem [resolvable:$true] %s44
      %50 = dma.hbm_to_vmem [thread:$0]  %s43, 1024, %s45, [#allocation5], 64, 64, 4
    $region17: #{neuralnet_forward.1} parent=1 // pred_fallthru
      _
    // Predicated region
    $region18: #{neuralnet_forward.1} parent=1 // pred_check
      _
    $region19: #{neuralnet_forward.1} parent=1 // pred_check_branch
      %52 = sbr.rel (0) target = $region21
    $region20: #{neuralnet_forward.1} parent=1 // pred_region
      _
    $region21: #{neuralnet_forward.1} parent=1 // pred_fallthru
      _
    // Predicated region
    $region22: #{neuralnet_forward.1} parent=1 // pred_check
      _
    $region23: #{neuralnet_forward.1} parent=1 // pred_check_branch
      %54 = sbr.rel (0) target = $region25
    $region24: #{neuralnet_forward.1} parent=1 // pred_region
      %56 = dma.done [#allocation3], 128
    $region25: #{neuralnet_forward.1} parent=1 // pred_fallthru
      _
    // Predicated region
    $region26: #{neuralnet_forward.1} parent=1 // pred_check
      _
    $region27: #{neuralnet_forward.1} parent=1 // pred_check_branch
      %58 = sbr.rel (0) target = $region29
    $region28: #{neuralnet_forward.1} parent=1 // pred_region
      %60 = dma.done [#allocation5], 256
    $region29: #{neuralnet_forward.1} parent=1 // pred_fallthru
      _
    // Predicated region
    $region30: #{neuralnet_forward.1} parent=1 // pred_check
      _
    $region31: #{neuralnet_forward.1} parent=1 // pred_check_branch
      %62 = sbr.rel (0) target = $region33
    $region32: #{neuralnet_forward.1} parent=1 // pred_region
      %64 = dma.done [#allocation5], 1024
    $region33: #{neuralnet_forward.1} parent=1 // pred_fallthru
      _
    %v66 = vld [vmem:[#allocation2] sm:$0xff]
    %v67 = vpack.c.bf16 %v66, %v66
    %v68 = vld [vmem:[#allocation4] sm:$0xf]
    %v69 = vld [vmem:[#allocation4 + $0x4] sm:$0xf]
    %v70 = vld [vmem:[#allocation4 + $0x8] sm:$0xf]
    %v71 = vld [vmem:[#allocation4 + $0xc] sm:$0xf]
    %v72 = vld [vmem:[%s2] sm:$0x1]
    %v74 = vperm.slane %v72, 0
    %v80 = vunpack.c.l.b16 %v68
    %v81 = vunpack.c.l.b16 %v69
    %v82 = vunpack.c.l.b16 %v70
    %v83 = vunpack.c.l.b16 %v71
    %v84 = vpack.c.b16 %v81, %v80
    %v85 = vpack.c.b16 %v83, %v82
    %vm88 = vcmask 261120
    %v90 = vsel %vm88, %v67, 0
    %92 = vmatpush.bf16.msra.mxu0 0
    %93 = vmatpush.bf16.msra.mxu0 0
    %94 = vmatpush.bf16.msra.mxu0 0
    %95 = vmatpush.bf16.msra.mxu0 0
    %96 = vmatpush.bf16.msra.mxu0 0
    %97 = vmatpush.bf16.msra.mxu0 0
    %98 = vmatpush.bf16.msra.mxu0 %v85
    %99 = vmatpush.bf16.msra.mxu0 %v84
    %100 = vmatmul.bf16.gmra.mxu0 %v90
    %v101 = vpop.f32.mrf.mxu0
    %v102 = vadd.f32 %v74, %v101
    %v103 = vpop.f32.mrf.mxu0
    %104 = vdwg.mxu0
    %v105 = vmax.f32 %v102, 0.0
    %v106 = vpack.c.bf16 %v105, %v105
    %v107 = vld [vmem:[#allocation6] sm:$0xf]
    %v108 = vld [vmem:[#allocation6 + $0x4] sm:$0xf]
    %v109 = vld [vmem:[#allocation6 + $0x8] sm:$0xf]
    %v110 = vld [vmem:[#allocation6 + $0xc] sm:$0xf]
    %v111 = vld [vmem:[#allocation6 + $0x10] sm:$0xf]
    %v112 = vld [vmem:[#allocation6 + $0x14] sm:$0xf]
    %v113 = vld [vmem:[#allocation6 + $0x18] sm:$0xf]
    %v114 = vld [vmem:[#allocation6 + $0x1c] sm:$0xf]
    %v115 = vld [vmem:[#allocation6 + $0x20] sm:$0xf]
    %v116 = vld [vmem:[#allocation6 + $0x24] sm:$0xf]
    %v117 = vld [vmem:[#allocation6 + $0x28] sm:$0xf]
    %v118 = vld [vmem:[#allocation6 + $0x2c] sm:$0xf]
    %v119 = vld [vmem:[#allocation6 + $0x30] sm:$0xf]
    %v120 = vld [vmem:[#allocation6 + $0x34] sm:$0xf]
    %v121 = vld [vmem:[#allocation6 + $0x38] sm:$0xf]
    %v122 = vld [vmem:[#allocation6 + $0x3c] sm:$0xf]
    %v139 = vunpack.c.l.b16 %v107
    %v140 = vunpack.c.l.b16 %v108
    %v141 = vunpack.c.l.b16 %v109
    %v142 = vunpack.c.l.b16 %v110
    %v143 = vunpack.c.l.b16 %v111
    %v144 = vunpack.c.l.b16 %v112
    %v145 = vunpack.c.l.b16 %v113
    %v146 = vunpack.c.l.b16 %v114
    %v147 = vunpack.c.l.b16 %v115
    %v148 = vunpack.c.l.b16 %v116
    %v149 = vunpack.c.l.b16 %v117
    %v150 = vunpack.c.l.b16 %v118
    %v151 = vunpack.c.l.b16 %v119
    %v152 = vunpack.c.l.b16 %v120
    %v153 = vunpack.c.l.b16 %v121
    %v154 = vunpack.c.l.b16 %v122
    %v155 = vpack.c.b16 %v140, %v139
    %v156 = vpack.c.b16 %v142, %v141
    %v157 = vpack.c.b16 %v144, %v143
    %v158 = vpack.c.b16 %v146, %v145
    %v159 = vpack.c.b16 %v148, %v147
    %v160 = vpack.c.b16 %v150, %v149
    %v161 = vpack.c.b16 %v152, %v151
    %v162 = vpack.c.b16 %v154, %v153
    %171 = vmatpush.bf16.msra.mxu0 %v162
    %172 = vmatpush.bf16.msra.mxu0 %v161
    %173 = vmatpush.bf16.msra.mxu0 %v160
    %174 = vmatpush.bf16.msra.mxu0 %v159
    %175 = vmatpush.bf16.msra.mxu0 %v158
    %176 = vmatpush.bf16.msra.mxu0 %v157
    %177 = vmatpush.bf16.msra.mxu0 %v156
    %178 = vmatpush.bf16.msra.mxu0 %v155
    %179 = vmatmul.bf16.gmra.mxu0 %v106
    %v180 = vpop.f32.mrf.mxu0
    %v181 = vadd.f32 0.0, %v180
    %v182 = vpop.f32.mrf.mxu0
    %183 = vdwg.mxu0
    %v184 = vld [vmem:[%s4] sm:$0x1]
    %v186 = vperm.slane %v184, 0
    %v188 = vadd.f32 %v181, %v186
    %vm189 = vcmask 31744
    %190 = vst.msk [vmem:[%s5] sm:$0xff] %vm189, %v188
    // Predicated region
    $region34: #{neuralnet_forward.1} parent=1 // pred_check
      _
    $region35: #{neuralnet_forward.1} parent=1 // pred_check_branch
      %192 = sbr.rel (0) target = $region37
    $region36: #{neuralnet_forward.1} parent=1 // pred_region
      _
    $region37: #{neuralnet_forward.1} parent=1 // pred_fallthru
      _
    // Predicated region
    $region38: #{neuralnet_forward.1} parent=1 // pred_check
      _
    $region39: #{neuralnet_forward.1} parent=1 // pred_check_branch
      %194 = sbr.rel (0) target = $region41
    $region40: #{neuralnet_forward.1} parent=1 // pred_region
      _
    $region41: #{neuralnet_forward.1} parent=1 // pred_fallthru
      _
    %195 = vsyncpa [#allocation3], 1
    %196 = vsyncpa [#allocation5], 1

</llo_original>
